<compile_context>
chip_gen: v6e
topology: v6e:2x2x1
jax: 0.10.0
libtpu: 0.0.40
codegen_flags: <defaults>
</compile_context>

<pallas_src>
import functools

import numpy as np
import jax
import jax.numpy as jnp
from jax import lax
from jax.experimental import pallas as pl
from jax.experimental.pallas import tpu as pltpu

_EPS = 1e-5


def _hardswish(x):
    return x * jnp.clip(x + 3.0, 0.0, 6.0) * (1.0 / 6.0)


# ----------------------------------------------------------------------------
# Pallas kernel: fused right branch, one batch element per grid step.
#   x_ref      : (1, Ci, HW)  all input channels (unused ones hit zero cols of w1)
#   w1_ref     : (Co, Ci)     conv_r1 1x1 weight, BN + channel_shuffle folded
#   b1_ref     : (Co, 1)
#   wd_ref     : (Co, 9)      depthwise 3x3 weight (BN folded), k = ky*3 + kx
#   bd_ref     : (Co, 1)
#   w2_ref     : (Co, Co)     pconv 1x1 weight, BN folded
#   b2_ref     : (Co, 1)
#   border_ref : (4, HW)      f32 edge masks: [w>=1, w<=W-2, h>=1, h<=H-2]
#   o_ref      : (1, Co, HW)
# ----------------------------------------------------------------------------
def _right_branch_kernel(x_ref, w1_ref, b1_ref, wd_ref, bd_ref, w2_ref, b2_ref,
                         border_ref, o_ref, *, W):
    x = x_ref[0]                                          # (Ci, HW)

    # conv_r1: 1x1 conv (BN folded) + hardswish  -- MXU matmul over channels.
    # Operands stay f32: with K <= 16 the MXU is nowhere near binding (the
    # kernel is layout/overhead bound), and f32 keeps numerics tight.
    y1 = jnp.dot(w1_ref[...], x, preferred_element_type=jnp.float32) + b1_ref[...]
    y1 = _hardswish(y1)                                   # (Co, HW), packed vregs

    # dwconv_r.dconv: depthwise 3x3, padding=1, BN folded, NO activation.
    # Shifted register views of y1 + precomputed border masks (no pad scratch).
    wd = wd_ref[...]                                      # (Co, 9)
    border = border_ref[...]                              # (4, HW)
    acc = y1 * wd[:, 4:5]                                 # center tap (dy=0, dx=0)
    for dy in (-1, 0, 1):
        for dx in (-1, 0, 1):
            if dy == 0 and dx == 0:
                continue
            k = (dy + 1) * 3 + (dx + 1)
            s = dy * W + dx
            # shifted[c, p] = y1[c, p + s]; wrap-around is killed by the mask.
            shifted = jnp.roll(y1, -s, axis=1)
            m = None
            if dx == -1:
                m = border[0:1, :]
            elif dx == 1:
                m = border[1:2, :]
            if dy == -1:
                m = border[2:3, :] if m is None else m * border[2:3, :]
            elif dy == 1:
                m = border[3:4, :] if m is None else m * border[3:4, :]
            acc = acc + (shifted * m) * wd[:, k:k + 1]
    acc = acc + bd_ref[...]

    # dwconv_r.pconv: 1x1 conv (BN folded) + hardswish
    y2 = jnp.dot(w2_ref[...], acc, preferred_element_type=jnp.float32) + b2_ref[...]
    o_ref[0] = _hardswish(y2).astype(o_ref.dtype)


def right_branch(x_flat, H, W, folded, border):
    """x_flat: (B, Ci, H*W) -> (B, Co, H*W)."""
    w1, b1, wd, bd, w2, b2 = folded
    B, Ci, HW = x_flat.shape
    Co = w1.shape[0]
    kt = wd.shape[1]
    kernel = functools.partial(_right_branch_kernel, W=W)
    # TODO(synk): for real YOLOX shapes (H,W ~ 80-160, Co ~ 116-232) tile over H
    # with a 1-row halo and set vmem_limit_bytes; whole-image blocks are fine at
    # these demo sizes on all of v5e/v6e/v7x.
    return pl.pallas_call(
        kernel,
        out_shape=jax.ShapeDtypeStruct((B, Co, HW), x_flat.dtype),
        grid_spec=pltpu.PrefetchScalarGridSpec(
            num_scalar_prefetch=0,
            grid=(B,),  # parallel over batch -> megacore split on v7x; ~0.35us/step elsewhere
            in_specs=[
                pl.BlockSpec((1, Ci, HW), lambda b: (b, 0, 0)),
                pl.BlockSpec((Co, Ci), lambda b: (0, 0)),
                pl.BlockSpec((Co, 1), lambda b: (0, 0)),
                pl.BlockSpec((Co, kt), lambda b: (0, 0)),
                pl.BlockSpec((Co, 1), lambda b: (0, 0)),
                pl.BlockSpec((Co, Co), lambda b: (0, 0)),
                pl.BlockSpec((Co, 1), lambda b: (0, 0)),
                pl.BlockSpec((4, HW), lambda b: (0, 0)),
            ],
            out_specs=pl.BlockSpec((1, Co, HW), lambda b: (b, 0, 0)),
        ),
        compiler_params=pltpu.CompilerParams(
            dimension_semantics=("parallel",)),
    )(x_flat, w1, b1, wd, bd, w2, b2, border)


# ----------------------------------------------------------------------------
# Glue helpers (plain JAX / numpy): shuffle permutations, masks, gather index.
# ----------------------------------------------------------------------------
def _shuffle_perm(c, groups=2):
    # channel_shuffle(x)[:, j] == x[:, perm[j]]
    j = np.arange(c)
    return (j % groups) * (c // groups) + (j // groups)


def _border_masks(H, W):
    p = np.arange(H * W)
    hh, ww = p // W, p % W
    m = np.stack([ww >= 1, ww <= W - 2, hh >= 1, hh <= H - 2]).astype(np.float32)
    return jnp.asarray(m)                                  # (4, H*W)


def _gather_index(c_in, c_out, l_ch, groups=2):
    # shuffle(concat([shuffle(x)[:l_ch], out_r]))  ==  concat([x, out_r])[idx]
    perm_in = _shuffle_perm(c_in, groups)
    perm_out = _shuffle_perm(c_out, groups)
    idx = []
    for j in range(c_out):
        k = int(perm_out[j])
        idx.append(int(perm_in[k]) if k < l_ch else c_in + (k - l_ch))
    return jnp.asarray(idx, jnp.int32)


def channel_shuffle(x, groups=2):
    b, c, h, w = x.shape
    x = x.reshape(b, groups, c // groups, h, w)
    x = jnp.transpose(x, (0, 2, 1, 3, 4))
    return x.reshape(b, c, h, w)


def shuffle_v2_reduce(x, folded, gather_idx, border):
    """x: NCHW float32 -> NCHW float32 (stride=1 variant)."""
    B, C, H, W = x.shape
    x_flat = x.reshape(B, C, H * W)                        # free reshape, no transpose
    out_r = right_branch(x_flat, H, W, folded, border)     # (B, Co_r, HW)
    combined = jnp.concatenate([x_flat, out_r], axis=1)
    out = jnp.take(combined, gather_idx, axis=1)           # concat + final shuffle = 1 gather
    return out.reshape(B, gather_idx.shape[0], H, W)


# ----------------------------------------------------------------------------
# Deterministic parameter construction + BN folding (+ shuffle folding into w1).
# ----------------------------------------------------------------------------
def make_params(key, in_channels, out_channels, c_ratio=0.5, ksize=3, groups=2):
    l_ch = int(out_channels * c_ratio)
    r_ch = in_channels - l_ch
    o_r = out_channels - l_ch

    keys = jax.random.split(key, 6)

    def bn_params(k, c):
        k1, k2, k3, k4 = jax.random.split(k, 4)
        gamma = 1.0 + 0.1 * jax.random.normal(k1, (c,), jnp.float32)
        beta = 0.1 * jax.random.normal(k2, (c,), jnp.float32)
        mean = 0.1 * jax.random.normal(k3, (c,), jnp.float32)
        var = 0.5 + jax.random.uniform(k4, (c,), jnp.float32)
        return gamma, beta, mean, var

    # conv_r1: 1x1 conv (o_r, r_ch), no bias, + BN
    w_r1 = 0.3 * jax.random.normal(keys[0], (o_r, r_ch), jnp.float32)
    bn_r1 = bn_params(keys[1], o_r)
    # dwconv_r.dconv: depthwise 3x3 (o_r, 3, 3) + BN (no activation)
    w_d = 0.3 * jax.random.normal(keys[2], (o_r, ksize, ksize), jnp.float32)
    bn_d = bn_params(keys[3], o_r)
    # dwconv_r.pconv: 1x1 conv (o_r, o_r) + BN
    w_p = 0.3 * jax.random.normal(keys[4], (o_r, o_r), jnp.float32)
    bn_p = bn_params(keys[5], o_r)

    def fold(w_oi, bn):
        gamma, beta, mean, var = bn
        scale = gamma / jnp.sqrt(var + _EPS)
        return w_oi * scale[:, None], beta - mean * scale

    w1_f, b1_f = fold(w_r1, bn_r1)                         # (o_r, r_ch), (o_r,)
    scale_d = bn_d[0] / jnp.sqrt(bn_d[3] + _EPS)
    wd_f = (w_d * scale_d[:, None, None]).reshape(o_r, ksize * ksize)
    bd_f = bn_d[1] - bn_d[2] * scale_d
    w2_f, b2_f = fold(w_p, bn_p)                           # (o_r, o_r), (o_r,)

    # Fold the input channel_shuffle + right-branch slice into w1's columns:
    # shuffled right-branch channel c comes from original channel r_src[c].
    r_src = _shuffle_perm(in_channels, groups)[l_ch:]
    w1_full = jnp.zeros((o_r, in_channels), jnp.float32).at[:, r_src].set(w1_f)

    folded = (
        w1_full,             # (o_r, C_in)
        b1_f[:, None],       # (o_r, 1)
        jnp.asarray(wd_f),   # (o_r, 9)
        bd_f[:, None],       # (o_r, 1)
        jnp.asarray(w2_f),   # (o_r, o_r)
        b2_f[:, None],       # (o_r, 1)
    )
    raw = (w_r1, bn_r1, w_d, bn_d, w_p, bn_p)
    return raw, folded, l_ch


# ----------------------------------------------------------------------------
# Pure-JAX reference (NCHW, un-fused, un-folded BN) for verification.
# ----------------------------------------------------------------------------
def reference(x, raw, l_ch, groups=2):
    w_r1, bn_r1, w_d, bn_d, w_p, bn_p = raw
    o_r = w_r1.shape[0]

    def bn(y, p):
        gamma, beta, mean, var = p
        s = (gamma / jnp.sqrt(var + _EPS))[None, :, None, None]
        return (y - mean[None, :, None, None]) * s + beta[None, :, None, None]

    x = channel_shuffle(x, groups)
    x_l, x_r = x[:, :l_ch], x[:, l_ch:]

    y = lax.conv_general_dilated(x_r, w_r1[:, :, None, None], (1, 1), 'VALID',
                                 dimension_numbers=('NCHW', 'OIHW', 'NCHW'))
    y = _hardswish(bn(y, bn_r1))
    y = lax.conv_general_dilated(y, w_d[:, None, :, :], (1, 1),
                                 ((1, 1), (1, 1)),
                                 dimension_numbers=('NCHW', 'OIHW', 'NCHW'),
                                 feature_group_count=o_r)
    y = bn(y, bn_d)   # no_depth_act=True -> no activation
    y = lax.conv_general_dilated(y, w_p[:, :, None, None], (1, 1), 'VALID',
                                 dimension_numbers=('NCHW', 'OIHW', 'NCHW'))
    y = _hardswish(bn(y, bn_p))

    out = jnp.concatenate([x_l, y], axis=1)
    return channel_shuffle(out, groups)


if __name__ == "__main__":
    key = jax.random.PRNGKey(0)
    k_x, k_p = jax.random.split(key)

    B, C_in, C_out, H, W = 2, 16, 16, 16, 16   # stride=1, c_ratio=0.5, groups=2
    x = jax.random.normal(k_x, (B, C_in, H, W), jnp.float32)

    raw, folded, l_ch = make_params(k_p, C_in, C_out)
    gather_idx = _gather_index(C_in, C_out, l_ch)
    border = _border_masks(H, W)

    out = shuffle_v2_reduce(x, folded, gather_idx, border)
    out = jax.block_until_ready(out)

    ref = reference(x, raw, l_ch)
    assert out.shape == (B, C_out, H, W)
    err = float(jnp.max(jnp.abs(out - ref)))
    assert jnp.allclose(out, ref, atol=1e-2, rtol=1e-2), f"max abs err {err}"

    print("KERNEL_OK")
</pallas_src>

<mosaic_0001>
module attributes {stable_mosaic.version = 11 : i64} {
  func.func @_right_branch_kernel(%arg0: i32, %arg1: memref<1x16x256xf32, #tpu.memory_space<vmem>>, %arg2: memref<8x16xf32, #tpu.memory_space<vmem>>, %arg3: memref<8x1xf32, #tpu.memory_space<vmem>>, %arg4: memref<8x9xf32, #tpu.memory_space<vmem>>, %arg5: memref<8x1xf32, #tpu.memory_space<vmem>>, %arg6: memref<8x8xf32, #tpu.memory_space<vmem>>, %arg7: memref<8x1xf32, #tpu.memory_space<vmem>>, %arg8: memref<4x256xf32, #tpu.memory_space<vmem>>, %arg9: memref<1x8x256xf32, #tpu.memory_space<vmem>>) attributes {dimension_semantics = [#tpu.dimension_semantics<parallel>], iteration_bounds = array<i64: 2>, scalar_prefetch = 0 : i64, scratch_operands = 0 : i64, tpu.core_type = #tpu.core_type<tc>, window_params = [{transform_indices = @transform_0, window_bounds = array<i64: 1, 16, 256>}, {pipeline_mode = #tpu.pipeline_mode<synchronous>, transform_indices = @transform_1, window_bounds = array<i64: 8, 16>}, {pipeline_mode = #tpu.pipeline_mode<synchronous>, transform_indices = @transform_2, window_bounds = array<i64: 8, 1>}, {pipeline_mode = #tpu.pipeline_mode<synchronous>, transform_indices = @transform_3, window_bounds = array<i64: 8, 9>}, {pipeline_mode = #tpu.pipeline_mode<synchronous>, transform_indices = @transform_4, window_bounds = array<i64: 8, 1>}, {pipeline_mode = #tpu.pipeline_mode<synchronous>, transform_indices = @transform_5, window_bounds = array<i64: 8, 8>}, {pipeline_mode = #tpu.pipeline_mode<synchronous>, transform_indices = @transform_6, window_bounds = array<i64: 8, 1>}, {pipeline_mode = #tpu.pipeline_mode<synchronous>, transform_indices = @transform_7, window_bounds = array<i64: 4, 256>}, {transform_indices = @transform_8, window_bounds = array<i64: 1, 8, 256>}]} {
    %c0 = arith.constant 0 : index
    %c0_0 = arith.constant 0 : index
    %c0_1 = arith.constant 0 : index
    %0 = vector.load %arg1[%c0, %c0_0, %c0_1] : memref<1x16x256xf32, #tpu.memory_space<vmem>>, vector<1x16x256xf32>
    %1 = vector.shape_cast %0 : vector<1x16x256xf32> to vector<16x256xf32>
    %c0_2 = arith.constant 0 : index
    %c0_3 = arith.constant 0 : index
    %2 = vector.load %arg2[%c0_2, %c0_3] : memref<8x16xf32, #tpu.memory_space<vmem>>, vector<8x16xf32>
    %cst = arith.constant dense<0.000000e+00> : vector<8x256xf32>
    %3 = tpu.matmul %2, %1, %cst {dimension_numbers = #tpu.dot_dimension_numbers<[1], [0], [0], [1], [0, 0, 1, 1], [], []>} : vector<8x16xf32>, vector<16x256xf32>, vector<8x256xf32> -> vector<8x256xf32>
    %c0_4 = arith.constant 0 : index
    %c0_5 = arith.constant 0 : index
    %4 = vector.load %arg3[%c0_4, %c0_5] : memref<8x1xf32, #tpu.memory_space<vmem>>, vector<8x1xf32>
    %5 = vector.broadcast %4 : vector<8x1xf32> to vector<8x256xf32>
    %6 = arith.addf %3, %5 : vector<8x256xf32>
    %cst_6 = arith.constant 3.000000e+00 : f32
    %7 = vector.broadcast %cst_6 : f32 to vector<8x256xf32>
    %8 = arith.addf %6, %7 : vector<8x256xf32>
    %cst_7 = arith.constant 0.000000e+00 : f32
    %cst_8 = arith.constant 6.000000e+00 : f32
    %9 = vector.broadcast %cst_7 : f32 to vector<8x256xf32>
    %10 = arith.maximumf %9, %8 : vector<8x256xf32>
    %11 = vector.broadcast %cst_8 : f32 to vector<8x256xf32>
    %12 = arith.minimumf %11, %10 : vector<8x256xf32>
    %13 = arith.mulf %6, %12 : vector<8x256xf32>
    %cst_9 = arith.constant 0.166666672 : f32
    %14 = vector.broadcast %cst_9 : f32 to vector<8x256xf32>
    %15 = arith.mulf %13, %14 : vector<8x256xf32>
    %c0_10 = arith.constant 0 : index
    %c0_11 = arith.constant 0 : index
    %16 = vector.load %arg4[%c0_10, %c0_11] : memref<8x9xf32, #tpu.memory_space<vmem>>, vector<8x9xf32>
    %c0_12 = arith.constant 0 : index
    %c0_13 = arith.constant 0 : index
    %17 = vector.load %arg8[%c0_12, %c0_13] : memref<4x256xf32, #tpu.memory_space<vmem>>, vector<4x256xf32>
    %18 = vector.extract_strided_slice %16 {offsets = [0, 4], sizes = [8, 1], strides = [1, 1]} : vector<8x9xf32> to vector<8x1xf32>
    %19 = vector.broadcast %18 : vector<8x1xf32> to vector<8x256xf32>
    %20 = arith.mulf %15, %19 : vector<8x256xf32>
    %21 = vector.extract_strided_slice %15 {offsets = [0, 239], sizes = [8, 17], strides = [1, 1]} : vector<8x256xf32> to vector<8x17xf32>
    %22 = vector.extract_strided_slice %15 {offsets = [0, 0], sizes = [8, 239], strides = [1, 1]} : vector<8x256xf32> to vector<8x239xf32>
    %23 = tpu.concatenate %21, %22 in 1 : vector<8x17xf32>, vector<8x239xf32> -> vector<8x256xf32>
    %24 = vector.extract_strided_slice %17 {offsets = [0, 0], sizes = [1, 256], strides = [1, 1]} : vector<4x256xf32> to vector<1x256xf32>
    %25 = vector.extract_strided_slice %17 {offsets = [2, 0], sizes = [1, 256], strides = [1, 1]} : vector<4x256xf32> to vector<1x256xf32>
    %26 = arith.mulf %24, %25 : vector<1x256xf32>
    %27 = vector.broadcast %26 : vector<1x256xf32> to vector<8x256xf32>
    %28 = arith.mulf %23, %27 : vector<8x256xf32>
    %29 = vector.extract_strided_slice %16 {offsets = [0, 0], sizes = [8, 1], strides = [1, 1]} : vector<8x9xf32> to vector<8x1xf32>
    %30 = vector.broadcast %29 : vector<8x1xf32> to vector<8x256xf32>
    %31 = arith.mulf %28, %30 : vector<8x256xf32>
    %32 = arith.addf %20, %31 : vector<8x256xf32>
    %33 = vector.extract_strided_slice %15 {offsets = [0, 240], sizes = [8, 16], strides = [1, 1]} : vector<8x256xf32> to vector<8x16xf32>
    %34 = vector.extract_strided_slice %15 {offsets = [0, 0], sizes = [8, 240], strides = [1, 1]} : vector<8x256xf32> to vector<8x240xf32>
    %35 = tpu.concatenate %33, %34 in 1 : vector<8x16xf32>, vector<8x240xf32> -> vector<8x256xf32>
    %36 = vector.extract_strided_slice %17 {offsets = [2, 0], sizes = [1, 256], strides = [1, 1]} : vector<4x256xf32> to vector<1x256xf32>
    %37 = vector.broadcast %36 : vector<1x256xf32> to vector<8x256xf32>
    %38 = arith.mulf %35, %37 : vector<8x256xf32>
    %39 = vector.extract_strided_slice %16 {offsets = [0, 1], sizes = [8, 1], strides = [1, 1]} : vector<8x9xf32> to vector<8x1xf32>
    %40 = vector.broadcast %39 : vector<8x1xf32> to vector<8x256xf32>
    %41 = arith.mulf %38, %40 : vector<8x256xf32>
    %42 = arith.addf %32, %41 : vector<8x256xf32>
    %43 = vector.extract_strided_slice %15 {offsets = [0, 241], sizes = [8, 15], strides = [1, 1]} : vector<8x256xf32> to vector<8x15xf32>
    %44 = vector.extract_strided_slice %15 {offsets = [0, 0], sizes = [8, 241], strides = [1, 1]} : vector<8x256xf32> to vector<8x241xf32>
    %45 = tpu.concatenate %43, %44 in 1 : vector<8x15xf32>, vector<8x241xf32> -> vector<8x256xf32>
    %46 = vector.extract_strided_slice %17 {offsets = [1, 0], sizes = [1, 256], strides = [1, 1]} : vector<4x256xf32> to vector<1x256xf32>
    %47 = vector.extract_strided_slice %17 {offsets = [2, 0], sizes = [1, 256], strides = [1, 1]} : vector<4x256xf32> to vector<1x256xf32>
    %48 = arith.mulf %46, %47 : vector<1x256xf32>
    %49 = vector.broadcast %48 : vector<1x256xf32> to vector<8x256xf32>
    %50 = arith.mulf %45, %49 : vector<8x256xf32>
    %51 = vector.extract_strided_slice %16 {offsets = [0, 2], sizes = [8, 1], strides = [1, 1]} : vector<8x9xf32> to vector<8x1xf32>
    %52 = vector.broadcast %51 : vector<8x1xf32> to vector<8x256xf32>
    %53 = arith.mulf %50, %52 : vector<8x256xf32>
    %54 = arith.addf %42, %53 : vector<8x256xf32>
    %55 = vector.extract_strided_slice %15 {offsets = [0, 255], sizes = [8, 1], strides = [1, 1]} : vector<8x256xf32> to vector<8x1xf32>
    %56 = vector.extract_strided_slice %15 {offsets = [0, 0], sizes = [8, 255], strides = [1, 1]} : vector<8x256xf32> to vector<8x255xf32>
    %57 = tpu.concatenate %55, %56 in 1 : vector<8x1xf32>, vector<8x255xf32> -> vector<8x256xf32>
    %58 = vector.extract_strided_slice %17 {offsets = [0, 0], sizes = [1, 256], strides = [1, 1]} : vector<4x256xf32> to vector<1x256xf32>
    %59 = vector.broadcast %58 : vector<1x256xf32> to vector<8x256xf32>
    %60 = arith.mulf %57, %59 : vector<8x256xf32>
    %61 = vector.extract_strided_slice %16 {offsets = [0, 3], sizes = [8, 1], strides = [1, 1]} : vector<8x9xf32> to vector<8x1xf32>
    %62 = vector.broadcast %61 : vector<8x1xf32> to vector<8x256xf32>
    %63 = arith.mulf %60, %62 : vector<8x256xf32>
    %64 = arith.addf %54, %63 : vector<8x256xf32>
    %65 = vector.extract_strided_slice %15 {offsets = [0, 1], sizes = [8, 255], strides = [1, 1]} : vector<8x256xf32> to vector<8x255xf32>
    %66 = vector.extract_strided_slice %15 {offsets = [0, 0], sizes = [8, 1], strides = [1, 1]} : vector<8x256xf32> to vector<8x1xf32>
    %67 = tpu.concatenate %65, %66 in 1 : vector<8x255xf32>, vector<8x1xf32> -> vector<8x256xf32>
    %68 = vector.extract_strided_slice %17 {offsets = [1, 0], sizes = [1, 256], strides = [1, 1]} : vector<4x256xf32> to vector<1x256xf32>
    %69 = vector.broadcast %68 : vector<1x256xf32> to vector<8x256xf32>
    %70 = arith.mulf %67, %69 : vector<8x256xf32>
    %71 = vector.extract_strided_slice %16 {offsets = [0, 5], sizes = [8, 1], strides = [1, 1]} : vector<8x9xf32> to vector<8x1xf32>
    %72 = vector.broadcast %71 : vector<8x1xf32> to vector<8x256xf32>
    %73 = arith.mulf %70, %72 : vector<8x256xf32>
    %74 = arith.addf %64, %73 : vector<8x256xf32>
    %75 = vector.extract_strided_slice %15 {offsets = [0, 15], sizes = [8, 241], strides = [1, 1]} : vector<8x256xf32> to vector<8x241xf32>
    %76 = vector.extract_strided_slice %15 {offsets = [0, 0], sizes = [8, 15], strides = [1, 1]} : vector<8x256xf32> to vector<8x15xf32>
    %77 = tpu.concatenate %75, %76 in 1 : vector<8x241xf32>, vector<8x15xf32> -> vector<8x256xf32>
    %78 = vector.extract_strided_slice %17 {offsets = [0, 0], sizes = [1, 256], strides = [1, 1]} : vector<4x256xf32> to vector<1x256xf32>
    %79 = vector.extract_strided_slice %17 {offsets = [3, 0], sizes = [1, 256], strides = [1, 1]} : vector<4x256xf32> to vector<1x256xf32>
    %80 = arith.mulf %78, %79 : vector<1x256xf32>
    %81 = vector.broadcast %80 : vector<1x256xf32> to vector<8x256xf32>
    %82 = arith.mulf %77, %81 : vector<8x256xf32>
    %83 = vector.extract_strided_slice %16 {offsets = [0, 6], sizes = [8, 1], strides = [1, 1]} : vector<8x9xf32> to vector<8x1xf32>
    %84 = vector.broadcast %83 : vector<8x1xf32> to vector<8x256xf32>
    %85 = arith.mulf %82, %84 : vector<8x256xf32>
    %86 = arith.addf %74, %85 : vector<8x256xf32>
    %87 = vector.extract_strided_slice %15 {offsets = [0, 16], sizes = [8, 240], strides = [1, 1]} : vector<8x256xf32> to vector<8x240xf32>
    %88 = vector.extract_strided_slice %15 {offsets = [0, 0], sizes = [8, 16], strides = [1, 1]} : vector<8x256xf32> to vector<8x16xf32>
    %89 = tpu.concatenate %87, %88 in 1 : vector<8x240xf32>, vector<8x16xf32> -> vector<8x256xf32>
    %90 = vector.extract_strided_slice %17 {offsets = [3, 0], sizes = [1, 256], strides = [1, 1]} : vector<4x256xf32> to vector<1x256xf32>
    %91 = vector.broadcast %90 : vector<1x256xf32> to vector<8x256xf32>
    %92 = arith.mulf %89, %91 : vector<8x256xf32>
    %93 = vector.extract_strided_slice %16 {offsets = [0, 7], sizes = [8, 1], strides = [1, 1]} : vector<8x9xf32> to vector<8x1xf32>
    %94 = vector.broadcast %93 : vector<8x1xf32> to vector<8x256xf32>
    %95 = arith.mulf %92, %94 : vector<8x256xf32>
    %96 = arith.addf %86, %95 : vector<8x256xf32>
    %97 = vector.extract_strided_slice %15 {offsets = [0, 17], sizes = [8, 239], strides = [1, 1]} : vector<8x256xf32> to vector<8x239xf32>
    %98 = vector.extract_strided_slice %15 {offsets = [0, 0], sizes = [8, 17], strides = [1, 1]} : vector<8x256xf32> to vector<8x17xf32>
    %99 = tpu.concatenate %97, %98 in 1 : vector<8x239xf32>, vector<8x17xf32> -> vector<8x256xf32>
    %100 = vector.extract_strided_slice %17 {offsets = [1, 0], sizes = [1, 256], strides = [1, 1]} : vector<4x256xf32> to vector<1x256xf32>
    %101 = vector.extract_strided_slice %17 {offsets = [3, 0], sizes = [1, 256], strides = [1, 1]} : vector<4x256xf32> to vector<1x256xf32>
    %102 = arith.mulf %100, %101 : vector<1x256xf32>
    %103 = vector.broadcast %102 : vector<1x256xf32> to vector<8x256xf32>
    %104 = arith.mulf %99, %103 : vector<8x256xf32>
    %105 = vector.extract_strided_slice %16 {offsets = [0, 8], sizes = [8, 1], strides = [1, 1]} : vector<8x9xf32> to vector<8x1xf32>
    %106 = vector.broadcast %105 : vector<8x1xf32> to vector<8x256xf32>
    %107 = arith.mulf %104, %106 : vector<8x256xf32>
    %108 = arith.addf %96, %107 : vector<8x256xf32>
    %c0_14 = arith.constant 0 : index
    %c0_15 = arith.constant 0 : index
    %109 = vector.load %arg5[%c0_14, %c0_15] : memref<8x1xf32, #tpu.memory_space<vmem>>, vector<8x1xf32>
    %110 = vector.broadcast %109 : vector<8x1xf32> to vector<8x256xf32>
    %111 = arith.addf %108, %110 : vector<8x256xf32>
    %c0_16 = arith.constant 0 : index
    %c0_17 = arith.constant 0 : index
    %112 = vector.load %arg6[%c0_16, %c0_17] : memref<8x8xf32, #tpu.memory_space<vmem>>, vector<8x8xf32>
    %cst_18 = arith.constant dense<0.000000e+00> : vector<8x256xf32>
    %113 = tpu.matmul %112, %111, %cst_18 {dimension_numbers = #tpu.dot_dimension_numbers<[1], [0], [0], [1], [0, 0, 1, 1], [], []>} : vector<8x8xf32>, vector<8x256xf32>, vector<8x256xf32> -> vector<8x256xf32>
    %c0_19 = arith.constant 0 : index
    %c0_20 = arith.constant 0 : index
    %114 = vector.load %arg7[%c0_19, %c0_20] : memref<8x1xf32, #tpu.memory_space<vmem>>, vector<8x1xf32>
    %115 = vector.broadcast %114 : vector<8x1xf32> to vector<8x256xf32>
    %116 = arith.addf %113, %115 : vector<8x256xf32>
    %cst_21 = arith.constant 3.000000e+00 : f32
    %117 = vector.broadcast %cst_21 : f32 to vector<8x256xf32>
    %118 = arith.addf %116, %117 : vector<8x256xf32>
    %cst_22 = arith.constant 0.000000e+00 : f32
    %cst_23 = arith.constant 6.000000e+00 : f32
    %119 = vector.broadcast %cst_22 : f32 to vector<8x256xf32>
    %120 = arith.maximumf %119, %118 : vector<8x256xf32>
    %121 = vector.broadcast %cst_23 : f32 to vector<8x256xf32>
    %122 = arith.minimumf %121, %120 : vector<8x256xf32>
    %123 = arith.mulf %116, %122 : vector<8x256xf32>
    %cst_24 = arith.constant 0.166666672 : f32
    %124 = vector.broadcast %cst_24 : f32 to vector<8x256xf32>
    %125 = arith.mulf %123, %124 : vector<8x256xf32>
    %c0_25 = arith.constant 0 : index
    %c0_26 = arith.constant 0 : index
    %c0_27 = arith.constant 0 : index
    %126 = vector.load %arg9[%c0_25, %c0_26, %c0_27] : memref<1x8x256xf32, #tpu.memory_space<vmem>>, vector<1x8x256xf32>
    %127 = vector.shape_cast %126 : vector<1x8x256xf32> to vector<8x256xf32>
    %128 = vector.shape_cast %125 : vector<8x256xf32> to vector<1x8x256xf32>
    tpu.vector_store %arg9[%c0_25, %c0_26, %c0_27], %128 {strides = array<i32>} : memref<1x8x256xf32, #tpu.memory_space<vmem>>, vector<1x8x256xf32>,
    return
  }
  func.func @transform_0(%arg0: i32) -> (i32, i32, i32) {
    %c0_i32 = arith.constant 0 : i32
    %c0_i32_0 = arith.constant 0 : i32
    %c0_i32_1 = arith.constant 0 : i32
    return %arg0, %c0_i32, %c0_i32_0 : i32, i32, i32
  }
  func.func @transform_1(%arg0: i32) -> (i32, i32) {
    %c0_i32 = arith.constant 0 : i32
    %c0_i32_0 = arith.constant 0 : i32
    %c0_i32_1 = arith.constant 0 : i32
    return %c0_i32, %c0_i32_0 : i32, i32
  }
  func.func @transform_2(%arg0: i32) -> (i32, i32) {
    %c0_i32 = arith.constant 0 : i32
    %c0_i32_0 = arith.constant 0 : i32
    %c0_i32_1 = arith.constant 0 : i32
    return %c0_i32, %c0_i32_0 : i32, i32
  }
  func.func @transform_3(%arg0: i32) -> (i32, i32) {
    %c0_i32 = arith.constant 0 : i32
    %c0_i32_0 = arith.constant 0 : i32
    %c0_i32_1 = arith.constant 0 : i32
    return %c0_i32, %c0_i32_0 : i32, i32
  }
  func.func @transform_4(%arg0: i32) -> (i32, i32) {
    %c0_i32 = arith.constant 0 : i32
    %c0_i32_0 = arith.constant 0 : i32
    %c0_i32_1 = arith.constant 0 : i32
    return %c0_i32, %c0_i32_0 : i32, i32
  }
  func.func @transform_5(%arg0: i32) -> (i32, i32) {
    %c0_i32 = arith.constant 0 : i32
    %c0_i32_0 = arith.constant 0 : i32
    %c0_i32_1 = arith.constant 0 : i32
    return %c0_i32, %c0_i32_0 : i32, i32
  }
  func.func @transform_6(%arg0: i32) -> (i32, i32) {
    %c0_i32 = arith.constant 0 : i32
    %c0_i32_0 = arith.constant 0 : i32
    %c0_i32_1 = arith.constant 0 : i32
    return %c0_i32, %c0_i32_0 : i32, i32
  }
  func.func @transform_7(%arg0: i32) -> (i32, i32) {
    %c0_i32 = arith.constant 0 : i32
    %c0_i32_0 = arith.constant 0 : i32
    %c0_i32_1 = arith.constant 0 : i32
    return %c0_i32, %c0_i32_0 : i32, i32
  }
  func.func @transform_8(%arg0: i32) -> (i32, i32, i32) {
    %c0_i32 = arith.constant 0 : i32
    %c0_i32_0 = arith.constant 0 : i32
    %c0_i32_1 = arith.constant 0 : i32
    return %arg0, %c0_i32, %c0_i32_0 : i32, i32, i32
  }
}

</mosaic_0001>

<llo_original>
// kernel: tpu_custom_call.1
$region0: #{tpu_custom_call.1}
  #allocation0 [shape = 'u32[]', space=smem, size = 0x4, offset = 0x4, fixed_abs, tag = 'smem constant byte address 0x4 - core index']
  #allocation1 [shape = 'u32[144,128]{1,0:T(1,128)}', space=vmem, size = 0x12000, scoped, tag = 'internal scratch']
  %s0 = inlined_call_operand.hbm [shape: f32[2,16,256], index: 0, kind: input, shape index: {}]
  %s1 = inlined_call_operand.vmem [shape: f32[8,16], index: 1, kind: input, shape index: {}]
  %s2 = inlined_call_operand.vmem [shape: f32[8,1], index: 2, kind: input, shape index: {}]
  %s3 = inlined_call_operand.vmem [shape: f32[8,9], index: 3, kind: input, shape index: {}]
  %s4 = inlined_call_operand.vmem [shape: f32[8,1], index: 4, kind: input, shape index: {}]
  %s5 = inlined_call_operand.vmem [shape: f32[8,8], index: 5, kind: input, shape index: {}]
  %s6 = inlined_call_operand.vmem [shape: f32[8,1], index: 6, kind: input, shape index: {}]
  %s7 = inlined_call_operand.vmem [shape: f32[4,256], index: 7, kind: input, shape index: {}]
  %s8 = inlined_call_operand.hbm [shape: f32[2,8,256], index: 8, kind: output, shape index: {}]
  %s9 = sld [smem:[#allocation0]]
  $region69: #{tpu_custom_call.1} parent=0
    _
  %s11 = ssub.s32 1, %s9
  %s12 = scalar_select 0, %s11, %s9
  $region1: #{tpu_custom_call.1} parent=0
    #allocation2 [shape = 'u8[32768]{0}', space=vmem, size = 0x8000, scoped, tag = 'input window, operand 0']
    #allocation3 [shape = 's32[2]{0}', space=sflag, size = 0x8, scoped, tag = 'scoped memory for tpu_custom_call.1']
    #allocation4 [shape = 's32[2]{0}', space=sflag, size = 0x8, scoped, tag = 'scoped memory for tpu_custom_call.1']
    #allocation5 [shape = 'u8[16384]{0}', space=vmem, size = 0x4000, scoped, tag = 'output window, operand 0']
    %13 = vsyncpa [#allocation3], 0
    %s14 = scalar_lea.sflag [#allocation3], 1
    %15 = vsyncpa %s14, 0
    %16 = vsyncpa [#allocation4], 0
    %s17 = scalar_lea.sflag [#allocation4], 1
    %18 = vsyncpa %s17, 0
    loop: start=0, step=1, limit=4
    $region2: #{tpu_custom_call.1} parent=1 // loop_pre_header
      _
    $region3: #{tpu_custom_call.1} parent=1 // loop_header
      %s20 = sphi 0, %s24
      %p21 = scmp.ge.s32.totalorder %s20, 4
      %s30 = sphi 0, %s32
      %s33 = sphi 0, %s30
      %s34 = sphi 0, %s33
      %s50 = sphi 0, %s34
      %s54 = sphi 0, %s54
      %s56 = sphi 0, %s54
      %s57 = sphi 0, %s56
      %s71 = sphi 0, %s57
      %s75 = sphi 0, %s75
      %s77 = sphi 0, %s75
      %s78 = sphi 0, %s77
      %s92 = sphi 0, %s78
      %s96 = sphi 0, %s96
      %s98 = sphi 0, %s96
      %s99 = sphi 0, %s98
      %s113 = sphi 0, %s99
      %s117 = sphi 0, %s117
      %s119 = sphi 0, %s117
      %s120 = sphi 0, %s119
      %s134 = sphi 0, %s120
      %s138 = sphi 0, %s138
      %s140 = sphi 0, %s138
      %s141 = sphi 0, %s140
      %s155 = sphi 0, %s141
      %s159 = sphi 0, %s159
      %s161 = sphi 0, %s159
      %s162 = sphi 0, %s161
      %s176 = sphi 0, %s162
      %s180 = sphi 0, %s180
      %s182 = sphi 0, %s180
      %s183 = sphi 0, %s182
      %s197 = sphi 0, %s183
      %s203 = sphi 0, %s205
      %s206 = sphi 0, %s203
      %s207 = sphi 0, %s206
      %s223 = sphi 0, %s207
    $region4: #{tpu_custom_call.1} parent=1 // loop_header_branch
      %23 = sbr.rel (%p21) target = $region8
    $region5: #{tpu_custom_call.1} parent=1 // loop_body
      %s25 = ssub.s32 %s20, 1
      %s26 = ssub.s32 %s20, 2
      %s27 = sadd.s32 %s20, 1
      %s28 = ssub.s32 %s20, %s27
      %p29 = scmp.eq.s32.totalorder %s28, 0
      %s31 = sadd.s32 %s30, 1
      %s32 = scalar_select %p29, %s30, %s31
      %p35 = pneg %p29
      %p36 = scmp.eq.s32.totalorder %s20, 1
      %p37 = por %p35, %p36
      %p38 = scmp.ne.s32.totalorder %s30, %s33
      %p39 = scmp.eq.s32.totalorder %s20, 0
      %p40 = por %p38, %p39
      %p41 = scmp.ne.s32.totalorder %s30, %s33
      %p42 = scmp.eq.s32.totalorder %s25, 1
      %p43 = por %p41, %p42
      %p44 = scmp.ne.s32.totalorder %s33, %s34
      %p45 = scmp.eq.s32.totalorder %s25, 0
      %p46 = por %p44, %p45
      %p47 = scmp.ne.s32.totalorder %s33, %s34
      %p48 = scmp.eq.s32.totalorder %s26, 1
      %p49 = por %p47, %p48
      %p51 = scmp.ne.s32.totalorder %s34, %s50
      %p52 = scmp.eq.s32.totalorder %s26, 0
      %p53 = por %p51, %p52
      %s55 = sadd.s32 %s54, 1
      %p58 = scmp.eq.s32.totalorder %s20, 1
      %p59 = scmp.ne.s32.totalorder %s54, %s56
      %p60 = scmp.eq.s32.totalorder %s20, 0
      %p61 = por %p59, %p60
      %p62 = scmp.ne.s32.totalorder %s54, %s56
      %p63 = scmp.eq.s32.totalorder %s25, 1
      %p64 = por %p62, %p63
      %p65 = scmp.ne.s32.totalorder %s56, %s57
      %p66 = scmp.eq.s32.totalorder %s25, 0
      %p67 = por %p65, %p66
      %p68 = scmp.ne.s32.totalorder %s56, %s57
      %p69 = scmp.eq.s32.totalorder %s26, 1
      %p70 = por %p68, %p69
      %p72 = scmp.ne.s32.totalorder %s57, %s71
      %p73 = scmp.eq.s32.totalorder %s26, 0
      %p74 = por %p72, %p73
      %s76 = sadd.s32 %s75, 1
      %p79 = scmp.eq.s32.totalorder %s20, 1
      %p80 = scmp.ne.s32.totalorder %s75, %s77
      %p81 = scmp.eq.s32.totalorder %s20, 0
      %p82 = por %p80, %p81
      %p83 = scmp.ne.s32.totalorder %s75, %s77
      %p84 = scmp.eq.s32.totalorder %s25, 1
      %p85 = por %p83, %p84
      %p86 = scmp.ne.s32.totalorder %s77, %s78
      %p87 = scmp.eq.s32.totalorder %s25, 0
      %p88 = por %p86, %p87
      %p89 = scmp.ne.s32.totalorder %s77, %s78
      %p90 = scmp.eq.s32.totalorder %s26, 1
      %p91 = por %p89, %p90
      %p93 = scmp.ne.s32.totalorder %s78, %s92
      %p94 = scmp.eq.s32.totalorder %s26, 0
      %p95 = por %p93, %p94
      %s97 = sadd.s32 %s96, 1
      %p100 = scmp.eq.s32.totalorder %s20, 1
      %p101 = scmp.ne.s32.totalorder %s96, %s98
      %p102 = scmp.eq.s32.totalorder %s20, 0
      %p103 = por %p101, %p102
      %p104 = scmp.ne.s32.totalorder %s96, %s98
      %p105 = scmp.eq.s32.totalorder %s25, 1
      %p106 = por %p104, %p105
      %p107 = scmp.ne.s32.totalorder %s98, %s99
      %p108 = scmp.eq.s32.totalorder %s25, 0
      %p109 = por %p107, %p108
      %p110 = scmp.ne.s32.totalorder %s98, %s99
      %p111 = scmp.eq.s32.totalorder %s26, 1
      %p112 = por %p110, %p111
      %p114 = scmp.ne.s32.totalorder %s99, %s113
      %p115 = scmp.eq.s32.totalorder %s26, 0
      %p116 = por %p114, %p115
      %s118 = sadd.s32 %s117, 1
      %p121 = scmp.eq.s32.totalorder %s20, 1
      %p122 = scmp.ne.s32.totalorder %s117, %s119
      %p123 = scmp.eq.s32.totalorder %s20, 0
      %p124 = por %p122, %p123
      %p125 = scmp.ne.s32.totalorder %s117, %s119
      %p126 = scmp.eq.s32.totalorder %s25, 1
      %p127 = por %p125, %p126
      %p128 = scmp.ne.s32.totalorder %s119, %s120
      %p129 = scmp.eq.s32.totalorder %s25, 0
      %p130 = por %p128, %p129
      %p131 = scmp.ne.s32.totalorder %s119, %s120
      %p132 = scmp.eq.s32.totalorder %s26, 1
      %p133 = por %p131, %p132
      %p135 = scmp.ne.s32.totalorder %s120, %s134
      %p136 = scmp.eq.s32.totalorder %s26, 0
      %p137 = por %p135, %p136
      %s139 = sadd.s32 %s138, 1
      %p142 = scmp.eq.s32.totalorder %s20, 1
      %p143 = scmp.ne.s32.totalorder %s138, %s140
      %p144 = scmp.eq.s32.totalorder %s20, 0
      %p145 = por %p143, %p144
      %p146 = scmp.ne.s32.totalorder %s138, %s140
      %p147 = scmp.eq.s32.totalorder %s25, 1
      %p148 = por %p146, %p147
      %p149 = scmp.ne.s32.totalorder %s140, %s141
      %p150 = scmp.eq.s32.totalorder %s25, 0
      %p151 = por %p149, %p150
      %p152 = scmp.ne.s32.totalorder %s140, %s141
      %p153 = scmp.eq.s32.totalorder %s26, 1
      %p154 = por %p152, %p153
      %p156 = scmp.ne.s32.totalorder %s141, %s155
      %p157 = scmp.eq.s32.totalorder %s26, 0
      %p158 = por %p156, %p157
      %s160 = sadd.s32 %s159, 1
      %p163 = scmp.eq.s32.totalorder %s20, 1
      %p164 = scmp.ne.s32.totalorder %s159, %s161
      %p165 = scmp.eq.s32.totalorder %s20, 0
      %p166 = por %p164, %p165
      %p167 = scmp.ne.s32.totalorder %s159, %s161
      %p168 = scmp.eq.s32.totalorder %s25, 1
      %p169 = por %p167, %p168
      %p170 = scmp.ne.s32.totalorder %s161, %s162
      %p171 = scmp.eq.s32.totalorder %s25, 0
      %p172 = por %p170, %p171
      %p173 = scmp.ne.s32.totalorder %s161, %s162
      %p174 = scmp.eq.s32.totalorder %s26, 1
      %p175 = por %p173, %p174
      %p177 = scmp.ne.s32.totalorder %s162, %s176
      %p178 = scmp.eq.s32.totalorder %s26, 0
      %p179 = por %p177, %p178
      %s181 = sadd.s32 %s180, 1
      %p184 = scmp.eq.s32.totalorder %s20, 1
      %p185 = scmp.ne.s32.totalorder %s180, %s182
      %p186 = scmp.eq.s32.totalorder %s20, 0
      %p187 = por %p185, %p186
      %p188 = scmp.ne.s32.totalorder %s180, %s182
      %p189 = scmp.eq.s32.totalorder %s25, 1
      %p190 = por %p188, %p189
      %p191 = scmp.ne.s32.totalorder %s182, %s183
      %p192 = scmp.eq.s32.totalorder %s25, 0
      %p193 = por %p191, %p192
      %p194 = scmp.ne.s32.totalorder %s182, %s183
      %p195 = scmp.eq.s32.totalorder %s26, 1
      %p196 = por %p194, %p195
      %p198 = scmp.ne.s32.totalorder %s183, %s197
      %p199 = scmp.eq.s32.totalorder %s26, 0
      %p200 = por %p198, %p199
      %s201 = ssub.s32 %s20, %s27
      %p202 = scmp.eq.s32.totalorder %s201, 0
      %s204 = sadd.s32 %s203, 1
      %s205 = scalar_select %p202, %s203, %s204
      %p208 = pneg %p202
      %p209 = scmp.eq.s32.totalorder %s20, 1
      %p210 = por %p208, %p209
      %p211 = scmp.ne.s32.totalorder %s203, %s206
      %p212 = scmp.eq.s32.totalorder %s20, 0
      %p213 = por %p211, %p212
      %p214 = scmp.ne.s32.totalorder %s203, %s206
      %p215 = scmp.eq.s32.totalorder %s25, 1
      %p216 = por %p214, %p215
      %p217 = scmp.ne.s32.totalorder %s206, %s207
      %p218 = scmp.eq.s32.totalorder %s25, 0
      %p219 = por %p217, %p218
      %p220 = scmp.ne.s32.totalorder %s206, %s207
      %p221 = scmp.eq.s32.totalorder %s26, 1
      %p222 = por %p220, %p221
      %p224 = scmp.ne.s32.totalorder %s207, %s223
      %p225 = scmp.eq.s32.totalorder %s26, 0
      %p226 = por %p224, %p225
      %p227 = scmp.le.s32.totalorder 1, %s20
      %p228 = scmp.lt.s32.totalorder %s20, 3
      %p229 = pnand %p227, %p228
      %p230 = pneg %p229
      // Predicated region
      $region9: #{tpu_custom_call.1} parent=5 // pred_check
        _
      $region10: #{tpu_custom_call.1} parent=5 // pred_check_branch
        %232 = sbr.rel (%p229) target = $region12
      $region11: #{tpu_custom_call.1} parent=5 // pred_region
        %s233 = ssub.s32 %s20, 1
        // Predicated region
        $region13: #{tpu_custom_call.1} parent=11 // pred_check
          %p234 = pneg %p67
        $region14: #{tpu_custom_call.1} parent=11 // pred_check_branch
          %236 = sbr.rel (%p234) target = $region16
        $region15: #{tpu_custom_call.1} parent=11 // pred_region
          _
        $region16: #{tpu_custom_call.1} parent=11 // pred_fallthru
          _
        // Predicated region
        $region17: #{tpu_custom_call.1} parent=11 // pred_check
          %p237 = pneg %p88
        $region18: #{tpu_custom_call.1} parent=11 // pred_check_branch
          %239 = sbr.rel (%p237) target = $region20
        $region19: #{tpu_custom_call.1} parent=11 // pred_region
          _
        $region20: #{tpu_custom_call.1} parent=11 // pred_fallthru
          _
        // Predicated region
        $region21: #{tpu_custom_call.1} parent=11 // pred_check
          %p240 = pneg %p109
        $region22: #{tpu_custom_call.1} parent=11 // pred_check_branch
          %242 = sbr.rel (%p240) target = $region24
        $region23: #{tpu_custom_call.1} parent=11 // pred_region
          _
        $region24: #{tpu_custom_call.1} parent=11 // pred_fallthru
          _
        // Predicated region
        $region25: #{tpu_custom_call.1} parent=11 // pred_check
          %p243 = pneg %p130
        $region26: #{tpu_custom_call.1} parent=11 // pred_check_branch
          %245 = sbr.rel (%p243) target = $region28
        $region27: #{tpu_custom_call.1} parent=11 // pred_region
          _
        $region28: #{tpu_custom_call.1} parent=11 // pred_fallthru
          _
        // Predicated region
        $region29: #{tpu_custom_call.1} parent=11 // pred_check
          %p246 = pneg %p151
        $region30: #{tpu_custom_call.1} parent=11 // pred_check_branch
          %248 = sbr.rel (%p246) target = $region32
        $region31: #{tpu_custom_call.1} parent=11 // pred_region
          _
        $region32: #{tpu_custom_call.1} parent=11 // pred_fallthru
          _
        // Predicated region
        $region33: #{tpu_custom_call.1} parent=11 // pred_check
          %p249 = pneg %p172
        $region34: #{tpu_custom_call.1} parent=11 // pred_check_branch
          %251 = sbr.rel (%p249) target = $region36
        $region35: #{tpu_custom_call.1} parent=11 // pred_region
          _
        $region36: #{tpu_custom_call.1} parent=11 // pred_fallthru
          _
        // Predicated region
        $region37: #{tpu_custom_call.1} parent=11 // pred_check
          %p252 = pneg %p193
        $region38: #{tpu_custom_call.1} parent=11 // pred_check_branch
          %254 = sbr.rel (%p252) target = $region40
        $region39: #{tpu_custom_call.1} parent=11 // pred_region
          _
        $region40: #{tpu_custom_call.1} parent=11 // pred_fallthru
          _
      $region12: #{tpu_custom_call.1} parent=5 // pred_fallthru
        _
      %p255 = scmp.lt.s32.totalorder %s20, 2
      // Predicated region
      $region41: #{tpu_custom_call.1} parent=5 // pred_check
        %p256 = pneg %p255
      $region42: #{tpu_custom_call.1} parent=5 // pred_check_branch
        %258 = sbr.rel (%p256) target = $region44
      $region43: #{tpu_custom_call.1} parent=5 // pred_region
        // Predicated region
        $region45: #{tpu_custom_call.1} parent=43 // pred_check
          %p259 = pneg %p40
        $region46: #{tpu_custom_call.1} parent=43 // pred_check_branch
          %261 = sbr.rel (%p259) target = $region48
        $region47: #{tpu_custom_call.1} parent=43 // pred_region
          %s262 = sand.u32 %s30, 1
          %s263 = scalar_lea.sflag [#allocation3], %s262
          %s264 = sand.u32 %s30, 1
          %s265 = smul.addr %s264, 32
          %s266 = scalar_lea.vmem [#allocation2], %s265
          %s268 = ssub.s32 512, 512
          %269 = vsyncadd %s263, %s268
          %s270 = smul.addr %s20, 4
          %s271 = smul.addr %s270, 128
          %s272 = scalar_lea.hbm %s0, %s271
          %s273 = sshll.u32 %s266, 4
          %s274 = int_to_ptr.vmem [resolvable:$true] %s273
          %279 = dma.hbm_to_vmem [thread:$0]  %s272, 512, %s274, %s263, 256, 256, 16
        $region48: #{tpu_custom_call.1} parent=43 // pred_fallthru
          _
      $region44: #{tpu_custom_call.1} parent=5 // pred_fallthru
        _
      %p280 = scmp.le.s32.totalorder 1, %s20
      %p281 = scmp.lt.s32.totalorder %s20, 3
      %p282 = pnand %p280, %p281
      %p283 = pneg %p282
      // Predicated region
      $region49: #{tpu_custom_call.1} parent=5 // pred_check
        _
      $region50: #{tpu_custom_call.1} parent=5 // pred_check_branch
        %285 = sbr.rel (%p282) target = $region52
      $region51: #{tpu_custom_call.1} parent=5 // pred_region
        %s286 = ssub.s32 %s20, 1
        %s287 = sand.u32 %s33, 1
        %s288 = scalar_lea.sflag [#allocation3], %s287
        %s289 = sand.u32 %s33, 1
        %s290 = smul.addr %s289, 32
        %s291 = scalar_lea.vmem [#allocation2], %s290
        // Predicated region
        $region53: #{tpu_custom_call.1} parent=51 // pred_check
          %p292 = pneg %p46
        $region54: #{tpu_custom_call.1} parent=51 // pred_check_branch
          %294 = sbr.rel (%p292) target = $region56
        $region55: #{tpu_custom_call.1} parent=51 // pred_region
          %295 = dma.done %s288, 512
        $region56: #{tpu_custom_call.1} parent=51 // pred_fallthru
          _
        %s296 = sand.u32 %s33, 1
        %s297 = scalar_lea.sflag [#allocation3], %s296
        %s298 = sand.u32 %s33, 1
        %s299 = smul.addr %s298, 32
        %s300 = scalar_lea.vmem [#allocation2], %s299
        %p301 = pneg %p46
        %p302 = pneg %p43
        %p303 = pneg %p67
        %p304 = pneg %p64
        %p305 = pneg %p88
        %p306 = pneg %p85
        %p307 = pneg %p109
        %p308 = pneg %p106
        %p309 = pneg %p130
        %p310 = pneg %p127
        %p311 = pneg %p151
        %p312 = pneg %p148
        %p313 = pneg %p172
        %p314 = pneg %p169
        %p315 = pneg %p193
        %p316 = pneg %p190
        %p317 = pneg %p219
        %p318 = pneg %p216
        %s319 = sand.u32 %s206, 1
        %s320 = scalar_lea.sflag [#allocation4], %s319
        %s321 = sand.u32 %s206, 1
        %s322 = smul.addr %s321, 16
        %s323 = scalar_lea.vmem [#allocation5], %s322
        %v324 = vld [vmem:[%s291] sm:$0xff]
        %v325 = vld [vmem:[%s291 + $0x8] sm:$0xff]
        %v326 = vld [vmem:[%s291 + $0x10] sm:$0xff]
        %v327 = vld [vmem:[%s291 + $0x18] sm:$0xff]
        %v328 = vld [vmem:[%s1] sm:$0xff]
        %v329 = vld [vmem:[%s2] sm:$0xff]
        %331 = vset.pattern.permute.xlu0 0
        %332 = vperm.xlu0 %331, %v329
        %v333 = vpop.permute.xlu0 %332
        %vm335 = vcmask 130048
        %v337 = vsel %vm335, %v328, 0
        %339 = vmatprep.subr.mxu0 0.0
        %340 = vmatpush1.msra.mxu0 0.0
        %341 = vmatprep.subr.mxu0 0.0
        %342 = vmatpush1.msra.mxu0 0.0
        %343 = vmatprep.subr.mxu0 0.0
        %344 = vmatpush1.msra.mxu0 0.0
        %345 = vmatprep.subr.mxu0 0.0
        %346 = vmatpush1.msra.mxu0 0.0
        %347 = vmatprep.subr.mxu0 0.0
        %348 = vmatpush1.msra.mxu0 0.0
        %349 = vmatprep.subr.mxu0 0.0
        %350 = vmatpush1.msra.mxu0 0.0
        %351 = vmatprep.subr.mxu0 0.0
        %352 = vmatpush1.msra.mxu0 0.0
        %353 = vmatprep.subr.mxu0 0.0
        %354 = vmatpush1.msra.mxu0 0.0
        %355 = vmatprep.subr.mxu0 0.0
        %356 = vmatpush1.msra.mxu0 0.0
        %357 = vmatprep.subr.mxu0 0.0
        %358 = vmatpush1.msra.mxu0 0.0
        %359 = vmatprep.subr.mxu0 0.0
        %360 = vmatpush1.msra.mxu0 0.0
        %361 = vmatprep.subr.mxu0 0.0
        %362 = vmatpush1.msra.mxu0 0.0
        %363 = vmatprep.subr.mxu0 0.0
        %364 = vmatpush1.msra.mxu0 0.0
        %365 = vmatprep.subr.mxu0 0.0
        %366 = vmatpush1.msra.mxu0 0.0
        %367 = vmatprep.subr.mxu0 %v327
        %368 = vmatpush1.msra.mxu0 %v326
        %369 = vmatprep.subr.mxu0 %v325
        %370 = vmatpush1.msra.mxu0 %v324
        %371 = vmatprep.subr.mxu0 0.0
        %372 = vmatpush2.msra.mxu0 0.0
        %373 = vmatprep.subr.mxu0 0.0
        %374 = vmatpush2.msra.mxu0 0.0
        %375 = vmatprep.subr.mxu0 0.0
        %376 = vmatpush2.msra.mxu0 0.0
        %377 = vmatprep.subr.mxu0 0.0
        %378 = vmatpush2.msra.mxu0 0.0
        %379 = vmatprep.subr.mxu0 0.0
        %380 = vmatpush2.msra.mxu0 0.0
        %381 = vmatprep.subr.mxu0 0.0
        %382 = vmatpush2.msra.mxu0 0.0
        %383 = vmatprep.subr.mxu0 0.0
        %384 = vmatpush2.msra.mxu0 0.0
        %385 = vmatprep.subr.mxu0 0.0
        %386 = vmatpush2.msra.mxu0 0.0
        %387 = vmatprep.subr.mxu0 0.0
        %388 = vmatpush2.msra.mxu0 0.0
        %389 = vmatprep.subr.mxu0 0.0
        %390 = vmatpush2.msra.mxu0 0.0
        %391 = vmatprep.subr.mxu0 0.0
        %392 = vmatpush2.msra.mxu0 0.0
        %393 = vmatprep.subr.mxu0 0.0
        %394 = vmatpush2.msra.mxu0 0.0
        %395 = vmatprep.subr.mxu0 0.0
        %396 = vmatpush2.msra.mxu0 0.0
        %397 = vmatprep.subr.mxu0 0.0
        %398 = vmatpush2.msra.mxu0 0.0
        %399 = vmatprep.subr.mxu0 0.0
        %400 = vmatpush2.msra.mxu0 0.0
        %401 = vmatprep.subr.mxu0 0.0
        %402 = vmatpush2.msra.mxu0 0.0
        %403 = vmatprep.mubr.f32.mxu0 0.0
        %404 = vmatmul.mubr.f32.gmra.mxu0 %v337
        %v405 = vpop.f32.mrf.mxu0
        %v406 = vadd.f32 %v333, %v405
        %v407 = vpop.f32.mrf.mxu0
        %v408 = vadd.f32 %v333, %v407
        %409 = vdwg.mxu0
        %v410 = vadd.f32 %v406, 3.0
        %v411 = vadd.f32 %v408, 3.0
        %v412 = vmax.f32 %v410, 0.0
        %v413 = vmax.f32 %v411, 0.0
        %v414 = vmin.f32 %v412, 6.0
        %v415 = vmin.f32 %v413, 6.0
        %v416 = vmul.f32 %v406, %v414
        %v417 = vmul.f32 %v408, %v415
        %v418 = vmul.f32 %v416, 0.16666667
        %v419 = vmul.f32 %v417, 0.16666667
        %v420 = vld [vmem:[%s3] sm:$0xff]
        %v421 = vld [vmem:[%s7] sm:$0xff]
        %423 = vset.pattern.permute.xlu0 4
        %424 = vperm.xlu0 %423, %v420
        %v425 = vpop.permute.xlu0 %424
        %v427 = vmul.f32 %v418, %v425
        %v428 = vmul.f32 %v419, %v425
        %430 = vrot.lane.b32.xlu0 %v419, 17
        %v431 = vpop.permute.xlu0 %430
        %434 = vrot.lane.b32.xlu0 %v418, 17
        %v435 = vpop.permute.xlu0 %434
        %vm436 = vcmask 138240
        %v437 = vsel %vm436, %v435, %v431
        %v440 = vsel %vm436, %v431, %v435
        %v442 = vrot.slane %v421, 6
        %v443 = vrot.slane %v442, 4
        %v445 = vmul.f32 %v421, %v443
        %v447 = vlaneseq
        %v448 = vshrl.u32 %v447, 7
        %v449 = vsub.s32 0, %v448
        %v450 = vrot.slane %v445, %v449
        %v451 = vlaneseq
        %v452 = vshrl.u32 %v451, 7
        %v453 = vsub.s32 4, %v452
        %v454 = vrot.slane %v445, %v453
        %v457 = vlaneseq
        %v458 = vshrl.u32 %v457, 7
        %v459 = vsub.s32 0, %v458
        %v460 = vrot.slane %v450, %v459
        %v461 = vlaneseq
        %v462 = vshrl.u32 %v461, 7
        %v463 = vsub.s32 0, %v462
        %v464 = vrot.slane %v454, %v463
        %v465 = vmul.f32 %v440, %v460
        %v466 = vmul.f32 %v437, %v464
        %467 = vset.pattern.permute.xlu0 0
        %468 = vperm.xlu0 %467, %v420
        %v469 = vpop.permute.xlu0 %468
        %v471 = vmul.f32 %v465, %v469
        %v472 = vmul.f32 %v466, %v469
        %v473 = vadd.f32 %v427, %v471
        %v474 = vadd.f32 %v428, %v472
        %475 = vrot.lane.b32.xlu0 %v419, 16
        %v476 = vpop.permute.xlu0 %475
        %478 = vrot.lane.b32.xlu0 %v418, 16
        %v479 = vpop.permute.xlu0 %478
        %v480 = vsel %vm335, %v479, %v476
        %v483 = vsel %vm335, %v476, %v479
        %v484 = vlaneseq
        %v485 = vshrl.u32 %v484, 7
        %v486 = vsub.s32 2, %v485
        %v487 = vrot.slane %v421, %v486
        %v488 = vlaneseq
        %v489 = vshrl.u32 %v488, 7
        %v490 = vsub.s32 6, %v489
        %v491 = vrot.slane %v421, %v490
        %v494 = vlaneseq
        %v495 = vshrl.u32 %v494, 7
        %v496 = vsub.s32 2, %v495
        %v497 = vrot.slane %v487, %v496
        %v498 = vlaneseq
        %v499 = vshrl.u32 %v498, 7
        %v500 = vsub.s32 2, %v499
        %v501 = vrot.slane %v491, %v500
        %v502 = vmul.f32 %v483, %v497
        %v503 = vmul.f32 %v480, %v501
        %504 = vset.pattern.permute.xlu0 1
        %505 = vperm.xlu0 %504, %v420
        %v506 = vpop.permute.xlu0 %505
        %v508 = vmul.f32 %v502, %v506
        %v509 = vmul.f32 %v503, %v506
        %v510 = vadd.f32 %v473, %v508
        %v511 = vadd.f32 %v474, %v509
        %512 = vrot.lane.b32.xlu0 %v419, 15
        %v513 = vpop.permute.xlu0 %512
        %515 = vrot.lane.b32.xlu0 %v418, 15
        %v516 = vpop.permute.xlu0 %515
        %vm517 = vcmask 121856
        %v518 = vsel %vm517, %v516, %v513
        %v521 = vsel %vm517, %v513, %v516
        %v522 = vrot.slane %v421, 5
        %v523 = vrot.slane %v522, 4
        %v525 = vmul.f32 %v421, %v523
        %v527 = vlaneseq
        %v528 = vshrl.u32 %v527, 7
        %v529 = vsub.s32 1, %v528
        %v530 = vrot.slane %v525, %v529
        %v531 = vlaneseq
        %v532 = vshrl.u32 %v531, 7
        %v533 = vsub.s32 5, %v532
        %v534 = vrot.slane %v525, %v533
        %v537 = vlaneseq
        %v538 = vshrl.u32 %v537, 7
        %v539 = vsub.s32 1, %v538
        %v540 = vrot.slane %v530, %v539
        %v541 = vlaneseq
        %v542 = vshrl.u32 %v541, 7
        %v543 = vsub.s32 1, %v542
        %v544 = vrot.slane %v534, %v543
        %v545 = vmul.f32 %v521, %v540
        %v546 = vmul.f32 %v518, %v544
        %547 = vset.pattern.permute.xlu0 2
        %548 = vperm.xlu0 %547, %v420
        %v549 = vpop.permute.xlu0 %548
        %v551 = vmul.f32 %v545, %v549
        %v552 = vmul.f32 %v546, %v549
        %v553 = vadd.f32 %v510, %v551
        %v554 = vadd.f32 %v511, %v552
        %555 = vrot.lane.b32.xlu0 %v419, 1
        %v556 = vpop.permute.xlu0 %555
        %558 = vrot.lane.b32.xlu0 %v418, 1
        %v559 = vpop.permute.xlu0 %558
        %vm560 = vcmask 7168
        %v561 = vsel %vm560, %v559, %v556
        %v564 = vsel %vm560, %v556, %v559
        %v565 = vlaneseq
        %v566 = vshrl.u32 %v565, 7
        %v567 = vsub.s32 0, %v566
        %v568 = vrot.slane %v421, %v567
        %v569 = vlaneseq
        %v570 = vshrl.u32 %v569, 7
        %v571 = vsub.s32 4, %v570
        %v572 = vrot.slane %v421, %v571
        %v575 = vlaneseq
        %v576 = vshrl.u32 %v575, 7
        %v577 = vsub.s32 0, %v576
        %v578 = vrot.slane %v568, %v577
        %v579 = vlaneseq
        %v580 = vshrl.u32 %v579, 7
        %v581 = vsub.s32 0, %v580
        %v582 = vrot.slane %v572, %v581
        %v583 = vmul.f32 %v564, %v578
        %v584 = vmul.f32 %v561, %v582
        %585 = vset.pattern.permute.xlu0 3
        %586 = vperm.xlu0 %585, %v420
        %v587 = vpop.permute.xlu0 %586
        %v589 = vmul.f32 %v583, %v587
        %v590 = vmul.f32 %v584, %v587
        %v591 = vadd.f32 %v553, %v589
        %v592 = vadd.f32 %v554, %v590
        %593 = vrot.lane.b32.xlu0 %v418, 127
        %v594 = vpop.permute.xlu0 %593
        %595 = vrot.lane.b32.xlu0 %v419, 127
        %v596 = vpop.permute.xlu0 %595
        %vm597 = vcmask 1039360
        %v598 = vsel %vm597, %v594, %v596
        %v602 = vsel %vm597, %v596, %v594
        %v603 = vlaneseq
        %v604 = vshrl.u32 %v603, 7
        %v605 = vsub.s32 1, %v604
        %v606 = vrot.slane %v421, %v605
        %v607 = vlaneseq
        %v608 = vshrl.u32 %v607, 7
        %v609 = vsub.s32 5, %v608
        %v610 = vrot.slane %v421, %v609
        %v613 = vlaneseq
        %v614 = vshrl.u32 %v613, 7
        %v615 = vsub.s32 1, %v614
        %v616 = vrot.slane %v606, %v615
        %v617 = vlaneseq
        %v618 = vshrl.u32 %v617, 7
        %v619 = vsub.s32 1, %v618
        %v620 = vrot.slane %v610, %v619
        %v621 = vmul.f32 %v598, %v616
        %v622 = vmul.f32 %v602, %v620
        %623 = vset.pattern.permute.xlu0 5
        %624 = vperm.xlu0 %623, %v420
        %v625 = vpop.permute.xlu0 %624
        %v627 = vmul.f32 %v621, %v625
        %v628 = vmul.f32 %v622, %v625
        %v629 = vadd.f32 %v591, %v627
        %v630 = vadd.f32 %v592, %v628
        %631 = vrot.lane.b32.xlu0 %v418, 113
        %v632 = vpop.permute.xlu0 %631
        %633 = vrot.lane.b32.xlu0 %v419, 113
        %v634 = vpop.permute.xlu0 %633
        %vm635 = vcmask 924672
        %v636 = vsel %vm635, %v632, %v634
        %v640 = vsel %vm635, %v634, %v632
        %v641 = vrot.slane %v421, 7
        %v642 = vrot.slane %v641, 4
        %v644 = vmul.f32 %v421, %v642
        %v646 = vlaneseq
        %v647 = vshrl.u32 %v646, 7
        %v648 = vsub.s32 0, %v647
        %v649 = vrot.slane %v644, %v648
        %v650 = vlaneseq
        %v651 = vshrl.u32 %v650, 7
        %v652 = vsub.s32 4, %v651
        %v653 = vrot.slane %v644, %v652
        %v656 = vlaneseq
        %v657 = vshrl.u32 %v656, 7
        %v658 = vsub.s32 0, %v657
        %v659 = vrot.slane %v649, %v658
        %v660 = vlaneseq
        %v661 = vshrl.u32 %v660, 7
        %v662 = vsub.s32 0, %v661
        %v663 = vrot.slane %v653, %v662
        %v664 = vmul.f32 %v636, %v659
        %v665 = vmul.f32 %v640, %v663
        %666 = vset.pattern.permute.xlu0 6
        %667 = vperm.xlu0 %666, %v420
        %v668 = vpop.permute.xlu0 %667
        %v670 = vmul.f32 %v664, %v668
        %v671 = vmul.f32 %v665, %v668
        %v672 = vadd.f32 %v629, %v670
        %v673 = vadd.f32 %v630, %v671
        %674 = vrot.lane.b32.xlu0 %v418, 112
        %v675 = vpop.permute.xlu0 %674
        %676 = vrot.lane.b32.xlu0 %v419, 112
        %v677 = vpop.permute.xlu0 %676
        %vm678 = vcmask 916480
        %v679 = vsel %vm678, %v675, %v677
        %v683 = vsel %vm678, %v677, %v675
        %v684 = vlaneseq
        %v685 = vshrl.u32 %v684, 7
        %v686 = vsub.s32 3, %v685
        %v687 = vrot.slane %v421, %v686
        %v688 = vlaneseq
        %v689 = vshrl.u32 %v688, 7
        %v690 = vsub.s32 7, %v689
        %v691 = vrot.slane %v421, %v690
        %v694 = vlaneseq
        %v695 = vshrl.u32 %v694, 7
        %v696 = vsub.s32 3, %v695
        %v697 = vrot.slane %v687, %v696
        %v698 = vlaneseq
        %v699 = vshrl.u32 %v698, 7
        %v700 = vsub.s32 3, %v699
        %v701 = vrot.slane %v691, %v700
        %v702 = vmul.f32 %v679, %v697
        %v703 = vmul.f32 %v683, %v701
        %704 = vset.pattern.permute.xlu0 7
        %705 = vperm.xlu0 %704, %v420
        %v706 = vpop.permute.xlu0 %705
        %v708 = vmul.f32 %v702, %v706
        %v709 = vmul.f32 %v703, %v706
        %v710 = vadd.f32 %v672, %v708
        %v711 = vadd.f32 %v673, %v709
        %712 = vrot.lane.b32.xlu0 %v418, 111
        %v713 = vpop.permute.xlu0 %712
        %714 = vrot.lane.b32.xlu0 %v419, 111
        %v715 = vpop.permute.xlu0 %714
        %vm716 = vcmask 908288
        %v717 = vsel %vm716, %v713, %v715
        %v721 = vsel %vm716, %v715, %v713
        %v722 = vlaneseq
        %v723 = vshrl.u32 %v722, 7
        %v724 = vsub.s32 1, %v723
        %v725 = vrot.slane %v445, %v724
        %v726 = vlaneseq
        %v727 = vshrl.u32 %v726, 7
        %v728 = vsub.s32 5, %v727
        %v729 = vrot.slane %v445, %v728
        %v732 = vlaneseq
        %v733 = vshrl.u32 %v732, 7
        %v734 = vsub.s32 1, %v733
        %v735 = vrot.slane %v725, %v734
        %v736 = vlaneseq
        %v737 = vshrl.u32 %v736, 7
        %v738 = vsub.s32 1, %v737
        %v739 = vrot.slane %v729, %v738
        %v740 = vmul.f32 %v717, %v735
        %v741 = vmul.f32 %v721, %v739
        %742 = vset.pattern.permute.xlu0 8
        %743 = vperm.xlu0 %742, %v420
        %v744 = vpop.permute.xlu0 %743
        %v746 = vmul.f32 %v740, %v744
        %v747 = vmul.f32 %v741, %v744
        %v748 = vadd.f32 %v710, %v746
        %v749 = vadd.f32 %v711, %v747
        %v750 = vld [vmem:[%s4] sm:$0xff]
        %752 = vset.pattern.permute.xlu0 0
        %753 = vperm.xlu0 %752, %v750
        %v754 = vpop.permute.xlu0 %753
        %v756 = vadd.f32 %v748, %v754
        %v757 = vadd.f32 %v749, %v754
        %v758 = vld [vmem:[%s5] sm:$0xff]
        %v759 = vld [vmem:[%s6] sm:$0xff]
        %761 = vset.pattern.permute.xlu0 0
        %762 = vperm.xlu0 %761, %v759
        %v763 = vpop.permute.xlu0 %762
        %vm765 = vcmask 64512
        %v767 = vsel %vm765, %v758, 0
        %769 = vmatprep.subr.mxu0 0.0
        %770 = vmatpush1.msra.mxu0 0.0
        %771 = vmatprep.subr.mxu0 0.0
        %772 = vmatpush1.msra.mxu0 0.0
        %773 = vmatprep.subr.mxu0 0.0
        %774 = vmatpush1.msra.mxu0 0.0
        %775 = vmatprep.subr.mxu0 0.0
        %776 = vmatpush1.msra.mxu0 0.0
        %777 = vmatprep.subr.mxu0 0.0
        %778 = vmatpush1.msra.mxu0 0.0
        %779 = vmatprep.subr.mxu0 0.0
        %780 = vmatpush1.msra.mxu0 0.0
        %781 = vmatprep.subr.mxu0 0.0
        %782 = vmatpush1.msra.mxu0 0.0
        %783 = vmatprep.subr.mxu0 0.0
        %784 = vmatpush1.msra.mxu0 0.0
        %785 = vmatprep.subr.mxu0 0.0
        %786 = vmatpush1.msra.mxu0 0.0
        %787 = vmatprep.subr.mxu0 0.0
        %788 = vmatpush1.msra.mxu0 0.0
        %789 = vmatprep.subr.mxu0 0.0
        %790 = vmatpush1.msra.mxu0 0.0
        %791 = vmatprep.subr.mxu0 0.0
        %792 = vmatpush1.msra.mxu0 0.0
        %793 = vmatprep.subr.mxu0 0.0
        %794 = vmatpush1.msra.mxu0 0.0
        %795 = vmatprep.subr.mxu0 0.0
        %796 = vmatpush1.msra.mxu0 0.0
        %797 = vmatprep.subr.mxu0 0.0
        %798 = vmatpush1.msra.mxu0 0.0
        %799 = vmatprep.subr.mxu0 %v757
        %800 = vmatpush1.msra.mxu0 %v756
        %801 = vmatprep.subr.mxu0 0.0
        %802 = vmatpush2.msra.mxu0 0.0
        %803 = vmatprep.subr.mxu0 0.0
        %804 = vmatpush2.msra.mxu0 0.0
        %805 = vmatprep.subr.mxu0 0.0
        %806 = vmatpush2.msra.mxu0 0.0
        %807 = vmatprep.subr.mxu0 0.0
        %808 = vmatpush2.msra.mxu0 0.0
        %809 = vmatprep.subr.mxu0 0.0
        %810 = vmatpush2.msra.mxu0 0.0
        %811 = vmatprep.subr.mxu0 0.0
        %812 = vmatpush2.msra.mxu0 0.0
        %813 = vmatprep.subr.mxu0 0.0
        %814 = vmatpush2.msra.mxu0 0.0
        %815 = vmatprep.subr.mxu0 0.0
        %816 = vmatpush2.msra.mxu0 0.0
        %817 = vmatprep.subr.mxu0 0.0
        %818 = vmatpush2.msra.mxu0 0.0
        %819 = vmatprep.subr.mxu0 0.0
        %820 = vmatpush2.msra.mxu0 0.0
        %821 = vmatprep.subr.mxu0 0.0
        %822 = vmatpush2.msra.mxu0 0.0
        %823 = vmatprep.subr.mxu0 0.0
        %824 = vmatpush2.msra.mxu0 0.0
        %825 = vmatprep.subr.mxu0 0.0
        %826 = vmatpush2.msra.mxu0 0.0
        %827 = vmatprep.subr.mxu0 0.0
        %828 = vmatpush2.msra.mxu0 0.0
        %829 = vmatprep.subr.mxu0 0.0
        %830 = vmatpush2.msra.mxu0 0.0
        %831 = vmatprep.subr.mxu0 0.0
        %832 = vmatpush2.msra.mxu0 0.0
        %833 = vmatprep.mubr.f32.mxu0 0.0
        %834 = vmatmul.mubr.f32.gmra.mxu0 %v767
        %v835 = vpop.f32.mrf.mxu0
        %v836 = vadd.f32 %v763, %v835
        %v837 = vpop.f32.mrf.mxu0
        %v838 = vadd.f32 %v763, %v837
        %839 = vdwg.mxu0
        %v840 = vadd.f32 %v836, 3.0
        %v841 = vadd.f32 %v838, 3.0
        %v842 = vmax.f32 %v840, 0.0
        %v843 = vmax.f32 %v841, 0.0
        %v844 = vmin.f32 %v842, 6.0
        %v845 = vmin.f32 %v843, 6.0
        %v846 = vmul.f32 %v836, %v844
        %v847 = vmul.f32 %v838, %v845
        %v848 = vmul.f32 %v846, 0.16666667
        %v849 = vmul.f32 %v847, 0.16666667
        %850 = vst [vmem:[%s323] sm:$0xff] %v848
        %851 = vst [vmem:[%s323 + $0x8] sm:$0xff] %v849
        %s852 = sand.u32 %s206, 1
        %s853 = scalar_lea.sflag [#allocation4], %s852
        %s854 = sand.u32 %s206, 1
        %s855 = smul.addr %s854, 16
        %s856 = scalar_lea.vmem [#allocation5], %s855
        // Predicated region
        $region57: #{tpu_custom_call.1} parent=51 // pred_check
          %p857 = pneg %p216
        $region58: #{tpu_custom_call.1} parent=51 // pred_check_branch
          %859 = sbr.rel (%p857) target = $region60
        $region59: #{tpu_custom_call.1} parent=51 // pred_region
          %s861 = ssub.s32 256, 256
          %862 = vsyncadd %s853, %s861
          %s863 = smul.addr %s25, 2
          %s864 = smul.addr %s863, 128
          %s865 = scalar_lea.hbm %s8, %s864
          %s867 = sshll.u32 %s856, 4
          %s868 = int_to_ptr.vmem [resolvable:$true] %s867
          %870 = dma.vmem_to_hbm [thread:$0]  %s868, 256, %s865, %s853
        $region60: #{tpu_custom_call.1} parent=51 // pred_fallthru
          _
      $region52: #{tpu_custom_call.1} parent=5 // pred_fallthru
        _
      %p871 = scmp.le.s32.totalorder 2, %s20
      // Predicated region
      $region61: #{tpu_custom_call.1} parent=5 // pred_check
        %p872 = pneg %p871
      $region62: #{tpu_custom_call.1} parent=5 // pred_check_branch
        %874 = sbr.rel (%p872) target = $region64
      $region63: #{tpu_custom_call.1} parent=5 // pred_region
        %s875 = ssub.s32 %s20, 2
        // Predicated region
        $region65: #{tpu_custom_call.1} parent=63 // pred_check
          %p876 = pneg %p222
        $region66: #{tpu_custom_call.1} parent=63 // pred_check_branch
          %878 = sbr.rel (%p876) target = $region68
        $region67: #{tpu_custom_call.1} parent=63 // pred_region
          %s879 = sand.u32 %s207, 1
          %s880 = scalar_lea.sflag [#allocation4], %s879
          %s881 = sand.u32 %s207, 1
          %s882 = smul.addr %s881, 16
          %s883 = scalar_lea.vmem [#allocation5], %s882
          %884 = dma.done %s880, 256
        $region68: #{tpu_custom_call.1} parent=63 // pred_fallthru
          _
      $region64: #{tpu_custom_call.1} parent=5 // pred_fallthru
        _
    $region6: #{tpu_custom_call.1} parent=1 // loop_footer
      %s24 = sadd.s32 1, %s20
    $region7: #{tpu_custom_call.1} parent=1 // loop_footer_branch
      %19 = sbr.rel target = $region3
    $region8: #{tpu_custom_call.1} parent=1 // loop_exit
      _
    %885 = vsyncpa [#allocation3], 1
    %s886 = scalar_lea.sflag [#allocation3], 1
    %887 = vsyncpa %s886, 1
    %888 = vsyncpa [#allocation4], 1
    %s889 = scalar_lea.sflag [#allocation4], 1
    %890 = vsyncpa %s889, 1

</llo_original>
